<compile_context>
chip_gen: v5e
topology: v5e:2x2
jax: 0.10.0
libtpu: 0.0.40
codegen_flags: <defaults>
</compile_context>

<pallas_src>
import string

import jax
import jax.numpy as jnp
from jax.experimental import pallas as pl
from jax.experimental.pallas import tpu as pltpu

all_letters = string.ascii_letters + " .,;'"
n_letters = len(all_letters)            # 57
n_hidden = 128
n_categories = 18
O_PAD = 128                             # lane-dense padded logits width
TOT = n_hidden + O_PAD                  # fused [i2h | i2o] output width = 256
NEG = -1.0e30                           # bias of padded logit lanes -> exp() == 0


def letter_to_index(letter):
    return all_letters.find(letter)


def lines_to_indices(lines):
    """Batch of equal-length strings -> (seq_len, batch) int32 letter indices."""
    T = len(lines[0])
    assert all(len(l) == T for l in lines)
    idx = [[letter_to_index(line[t]) for line in lines] for t in range(T)]
    return jnp.asarray(idx, dtype=jnp.int32)


# ---------------------------------------------------------------------------
# Pallas kernel: whole sequence, grid over time, hidden carried in VMEM
# ---------------------------------------------------------------------------
def rnn_seq_kernel(idx_ref,      # SMEM (T, B) int32            (scalar prefetch)
                   w_x_ref,      # VMEM (n_letters, 1, TOT) f32  resident
                   w_h_ref,      # VMEM (H, TOT) bf16            resident
                   b_ref,        # VMEM (1, TOT) f32             resident
                   h0_ref,       # VMEM (B, H) f32               resident
                   out_ref,      # VMEM (1, B, O_PAD) f32        per-step block
                   h_fin_ref):   # VMEM (B, H) f32               resident accumulator
    t = pl.program_id(0)
    B, H = h_fin_ref.shape

    @pl.when(t == 0)
    def _init():
        h_fin_ref[...] = h0_ref[...]

    h_prev = h_fin_ref[...]                                     # (B, H) f32

    # one_hot(x) @ W_x  ==  row gather of W_x at the per-sequence letter index
    rows = [w_x_ref[idx_ref[t, b]] for b in range(B)]           # each (1, TOT) f32
    x_part = jnp.concatenate(rows, axis=0)                      # (B, TOT) f32

    # hidden @ [W_hh | W_ho] on the MXU: bf16 inputs, f32 accumulation
    h_part = jnp.dot(h_prev.astype(jnp.bfloat16), w_h_ref[...],
                     preferred_element_type=jnp.float32)        # (B, TOT) f32

    z = x_part + h_part + b_ref[...]                            # (B, TOT) f32

    h_new = z[:, :H]                                            # (B, H)
    logits = z[:, H:]                                           # (B, O_PAD); pads at -1e30

    # numerically-stable log-softmax (f32); padded lanes contribute exp(-1e30)=0
    m = jnp.max(logits, axis=1, keepdims=True)
    shifted = logits - m
    lse = jnp.log(jnp.sum(jnp.exp(shifted), axis=1, keepdims=True))

    out_ref[0] = shifted - lse
    h_fin_ref[...] = h_new


def rnn_forward(letter_idx, h0, packed_params):
    """Run the RNN over a batch of sequences in one fused Pallas kernel.

    letter_idx : (T, B) int32 letter indices,  h0 : (B, H) f32 initial hidden.
    Returns (log_probs (T, B, n_categories), final_hidden (B, H)).
    """
    w_x, w_h, b = packed_params
    T, B = letter_idx.shape
    H = h0.shape[1]

    flops = 2 * T * B * H * TOT
    transcendentals = T * B * (O_PAD + 1)
    bytes_accessed = (w_x.size * 4 + w_h.size * 2 + b.size * 4 + h0.size * 4
                      + letter_idx.size * 4 + T * B * O_PAD * 4 + B * H * 4)

    grid_spec = pltpu.PrefetchScalarGridSpec(
        num_scalar_prefetch=1,
        grid=(T,),
        in_specs=[
            pl.BlockSpec((n_letters, 1, TOT), lambda t, idx: (0, 0, 0)),  # W_x resident
            pl.BlockSpec((H, TOT), lambda t, idx: (0, 0)),                # W_h resident
            pl.BlockSpec((1, TOT), lambda t, idx: (0, 0)),                # bias resident
            pl.BlockSpec((B, H), lambda t, idx: (0, 0)),                  # h0 resident
        ],
        out_specs=(
            pl.BlockSpec((1, B, O_PAD), lambda t, idx: (t, 0, 0)),        # per-step logp
            pl.BlockSpec((B, H), lambda t, idx: (0, 0)),                  # hidden carry
        ),
    )

    out_pad, h_final = pl.pallas_call(
        rnn_seq_kernel,
        grid_spec=grid_spec,
        out_shape=(
            jax.ShapeDtypeStruct((T, B, O_PAD), jnp.float32),
            jax.ShapeDtypeStruct((B, H), jnp.float32),
        ),
        compiler_params=pltpu.CompilerParams(
            dimension_semantics=("arbitrary",)),                 # recurrent time axis
        cost_estimate=pl.CostEstimate(flops=flops,
                                      transcendentals=transcendentals,
                                      bytes_accessed=bytes_accessed),
    )(letter_idx, w_x, w_h, b, h0)

    return out_pad[:, :, :n_categories], h_final


# ---------------------------------------------------------------------------
# Parameter init (nn.Linear default: U(-1/sqrt(fan_in), +)) and kernel packing
# ---------------------------------------------------------------------------
def init_params(key, input_size, hidden_size, output_size):
    c = input_size + hidden_size
    bound = 1.0 / (c ** 0.5)
    k1, k2, k3, k4 = jax.random.split(key, 4)
    # stored as (in_features, out_features) so y = x @ W + b
    w_i2h = jax.random.uniform(k1, (c, hidden_size), jnp.float32, -bound, bound)
    b_i2h = jax.random.uniform(k2, (hidden_size,), jnp.float32, -bound, bound)
    w_i2o = jax.random.uniform(k3, (c, output_size), jnp.float32, -bound, bound)
    b_i2o = jax.random.uniform(k4, (output_size,), jnp.float32, -bound, bound)
    return w_i2h, b_i2h, w_i2o, b_i2o


def pack_params(w_i2h, b_i2h, w_i2o, b_i2o):
    H = w_i2h.shape[1]
    O = w_i2o.shape[1]
    assert H == n_hidden and O <= O_PAD

    # input-rows of the two Linears, fused along the output dim (f32, gathered)
    w_x = jnp.zeros((n_letters, TOT), jnp.float32)
    w_x = w_x.at[:, :H].set(w_i2h[:n_letters])
    w_x = w_x.at[:, H:H + O].set(w_i2o[:n_letters])
    w_x = w_x.reshape(n_letters, 1, TOT)          # leading-dim-gatherable layout

    # hidden-rows, fused and cast to bf16 for the MXU
    w_h = jnp.zeros((H, TOT), jnp.float32)
    w_h = w_h.at[:, :H].set(w_i2h[n_letters:])
    w_h = w_h.at[:, H:H + O].set(w_i2o[n_letters:])
    w_h = w_h.astype(jnp.bfloat16)

    # fused bias; padded logit lanes get -1e30 so they vanish in the softmax
    b = jnp.full((1, TOT), NEG, jnp.float32)
    b = b.at[0, :H].set(b_i2h)
    b = b.at[0, H:H + O].set(b_i2o)
    return w_x, w_h, b


# ---------------------------------------------------------------------------
# Pure-JAX reference with the same precision choices (bf16 recurrent matmul)
# ---------------------------------------------------------------------------
def rnn_reference(letter_idx, h0, raw_params):
    w_i2h, b_i2h, w_i2o, b_i2o = raw_params
    wx_h, wh_h = w_i2h[:n_letters], w_i2h[n_letters:]
    wx_o, wh_o = w_i2o[:n_letters], w_i2o[n_letters:]
    h = h0
    outs = []
    for t in range(letter_idx.shape[0]):
        hb = h.astype(jnp.bfloat16)
        xh = wx_h[letter_idx[t]]                          # exact one-hot row gather
        xo = wx_o[letter_idx[t]]
        hh = jnp.dot(hb, wh_h.astype(jnp.bfloat16), preferred_element_type=jnp.float32)
        ho = jnp.dot(hb, wh_o.astype(jnp.bfloat16), preferred_element_type=jnp.float32)
        h_new = xh + hh + b_i2h
        logits = xo + ho + b_i2o
        outs.append(jax.nn.log_softmax(logits, axis=1))
        h = h_new
    return jnp.stack(outs, axis=0), h


if __name__ == "__main__":
    key = jax.random.PRNGKey(0)
    raw_params = init_params(key, n_letters, n_hidden, n_categories)
    packed = pack_params(*raw_params)

    # B=8 independent length-6 sequences (sublane-aligned batch); row 0 == 'Albert'
    names = ["Albert", "Hinton", "Turing", "Lovela",
             "Curies", "Darwin", "Newton", "Galile"]
    letter_idx = lines_to_indices(names)                      # (6, 8) int32
    h0 = jnp.zeros((len(names), n_hidden), jnp.float32)       # initHidden() per row

    fwd = jax.jit(rnn_forward)
    out, h_fin = fwd(letter_idx, h0, packed)
    out = jax.block_until_ready(out)
    h_fin = jax.block_until_ready(h_fin)

    assert out.shape == (letter_idx.shape[0], len(names), n_categories)
    assert h_fin.shape == (len(names), n_hidden)

    # log-softmax rows sum to 1 in prob space
    probs = jnp.sum(jnp.exp(out), axis=-1)
    assert bool(jnp.all(jnp.abs(probs - 1.0) < 1e-4))

    # matches a pure-JAX reference using the same precision choices
    ref_out, ref_h = rnn_reference(letter_idx, h0, raw_params)
    assert bool(jnp.allclose(out, ref_out, atol=1e-3, rtol=1e-3))
    assert bool(jnp.allclose(h_fin, ref_h, atol=1e-3, rtol=1e-3))

    print("KERNEL_OK")
</pallas_src>

<mosaic_0001>
module attributes {stable_mosaic.version = 11 : i64} {
  func.func @rnn_seq_kernel(%arg0: i32, %arg1: memref<6x8xi32, #tpu.memory_space<smem>>, %arg2: memref<57x1x256xf32, #tpu.memory_space<vmem>>, %arg3: memref<128x256xbf16, #tpu.memory_space<vmem>>, %arg4: memref<1x256xf32, #tpu.memory_space<vmem>>, %arg5: memref<8x128xf32, #tpu.memory_space<vmem>>, %arg6: memref<1x8x128xf32, #tpu.memory_space<vmem>>, %arg7: memref<8x128xf32, #tpu.memory_space<vmem>>) attributes {dimension_semantics = [#tpu.dimension_semantics<arbitrary>], iteration_bounds = array<i64: 6>, scalar_prefetch = 1 : i64, scratch_operands = 0 : i64, tpu.core_type = #tpu.core_type<tc>, window_params = [{pipeline_mode = #tpu.pipeline_mode<synchronous>, transform_indices = @transform_0, window_bounds = array<i64: 57, 1, 256>}, {pipeline_mode = #tpu.pipeline_mode<synchronous>, transform_indices = @transform_1, window_bounds = array<i64: 128, 256>}, {pipeline_mode = #tpu.pipeline_mode<synchronous>, transform_indices = @transform_2, window_bounds = array<i64: 1, 256>}, {pipeline_mode = #tpu.pipeline_mode<synchronous>, transform_indices = @transform_3, window_bounds = array<i64: 8, 128>}, {transform_indices = @transform_4, window_bounds = array<i64: 1, 8, 128>}, {pipeline_mode = #tpu.pipeline_mode<synchronous>, transform_indices = @transform_5, window_bounds = array<i64: 8, 128>}]} {
    %c0_i32 = arith.constant 0 : i32
    %0 = arith.cmpi eq, %arg0, %c0_i32 : i32
    %1 = arith.extui %0 : i1 to i32
    %c0_i32_0 = arith.constant 0 : i32
    %2 = arith.cmpi ne, %1, %c0_i32_0 : i32
    scf.if %2 {
      %c0_30 = arith.constant 0 : index
      %c0_31 = arith.constant 0 : index
      %68 = vector.load %arg5[%c0_30, %c0_31] : memref<8x128xf32, #tpu.memory_space<vmem>>, vector<8x128xf32>
      %c0_32 = arith.constant 0 : index
      %c0_33 = arith.constant 0 : index
      %69 = vector.load %arg7[%c0_32, %c0_33] : memref<8x128xf32, #tpu.memory_space<vmem>>, vector<8x128xf32>
      tpu.vector_store %arg7[%c0_32, %c0_33], %68 {strides = array<i32>} : memref<8x128xf32, #tpu.memory_space<vmem>>, vector<8x128xf32>,
    } else {
    }
    %c0 = arith.constant 0 : index
    %c0_1 = arith.constant 0 : index
    %3 = vector.load %arg7[%c0, %c0_1] : memref<8x128xf32, #tpu.memory_space<vmem>>, vector<8x128xf32>
    %4 = arith.index_cast %arg0 : i32 to index
    %c0_2 = arith.constant 0 : index
    %5 = memref.load %arg1[%4, %c0_2] : memref<6x8xi32, #tpu.memory_space<smem>>
    %6 = arith.index_cast %5 : i32 to index
    %c0_3 = arith.constant 0 : index
    %c0_4 = arith.constant 0 : index
    %7 = vector.load %arg2[%6, %c0_3, %c0_4] : memref<57x1x256xf32, #tpu.memory_space<vmem>>, vector<1x1x256xf32>
    %8 = vector.shape_cast %7 : vector<1x1x256xf32> to vector<1x256xf32>
    %9 = arith.index_cast %arg0 : i32 to index
    %c1 = arith.constant 1 : index
    %10 = memref.load %arg1[%9, %c1] : memref<6x8xi32, #tpu.memory_space<smem>>
    %11 = arith.index_cast %10 : i32 to index
    %c0_5 = arith.constant 0 : index
    %c0_6 = arith.constant 0 : index
    %12 = vector.load %arg2[%11, %c0_5, %c0_6] : memref<57x1x256xf32, #tpu.memory_space<vmem>>, vector<1x1x256xf32>
    %13 = vector.shape_cast %12 : vector<1x1x256xf32> to vector<1x256xf32>
    %14 = arith.index_cast %arg0 : i32 to index
    %c2 = arith.constant 2 : index
    %15 = memref.load %arg1[%14, %c2] : memref<6x8xi32, #tpu.memory_space<smem>>
    %16 = arith.index_cast %15 : i32 to index
    %c0_7 = arith.constant 0 : index
    %c0_8 = arith.constant 0 : index
    %17 = vector.load %arg2[%16, %c0_7, %c0_8] : memref<57x1x256xf32, #tpu.memory_space<vmem>>, vector<1x1x256xf32>
    %18 = vector.shape_cast %17 : vector<1x1x256xf32> to vector<1x256xf32>
    %19 = arith.index_cast %arg0 : i32 to index
    %c3 = arith.constant 3 : index
    %20 = memref.load %arg1[%19, %c3] : memref<6x8xi32, #tpu.memory_space<smem>>
    %21 = arith.index_cast %20 : i32 to index
    %c0_9 = arith.constant 0 : index
    %c0_10 = arith.constant 0 : index
    %22 = vector.load %arg2[%21, %c0_9, %c0_10] : memref<57x1x256xf32, #tpu.memory_space<vmem>>, vector<1x1x256xf32>
    %23 = vector.shape_cast %22 : vector<1x1x256xf32> to vector<1x256xf32>
    %24 = arith.index_cast %arg0 : i32 to index
    %c4 = arith.constant 4 : index
    %25 = memref.load %arg1[%24, %c4] : memref<6x8xi32, #tpu.memory_space<smem>>
    %26 = arith.index_cast %25 : i32 to index
    %c0_11 = arith.constant 0 : index
    %c0_12 = arith.constant 0 : index
    %27 = vector.load %arg2[%26, %c0_11, %c0_12] : memref<57x1x256xf32, #tpu.memory_space<vmem>>, vector<1x1x256xf32>
    %28 = vector.shape_cast %27 : vector<1x1x256xf32> to vector<1x256xf32>
    %29 = arith.index_cast %arg0 : i32 to index
    %c5 = arith.constant 5 : index
    %30 = memref.load %arg1[%29, %c5] : memref<6x8xi32, #tpu.memory_space<smem>>
    %31 = arith.index_cast %30 : i32 to index
    %c0_13 = arith.constant 0 : index
    %c0_14 = arith.constant 0 : index
    %32 = vector.load %arg2[%31, %c0_13, %c0_14] : memref<57x1x256xf32, #tpu.memory_space<vmem>>, vector<1x1x256xf32>
    %33 = vector.shape_cast %32 : vector<1x1x256xf32> to vector<1x256xf32>
    %34 = arith.index_cast %arg0 : i32 to index
    %c6 = arith.constant 6 : index
    %35 = memref.load %arg1[%34, %c6] : memref<6x8xi32, #tpu.memory_space<smem>>
    %36 = arith.index_cast %35 : i32 to index
    %c0_15 = arith.constant 0 : index
    %c0_16 = arith.constant 0 : index
    %37 = vector.load %arg2[%36, %c0_15, %c0_16] : memref<57x1x256xf32, #tpu.memory_space<vmem>>, vector<1x1x256xf32>
    %38 = vector.shape_cast %37 : vector<1x1x256xf32> to vector<1x256xf32>
    %39 = arith.index_cast %arg0 : i32 to index
    %c7 = arith.constant 7 : index
    %40 = memref.load %arg1[%39, %c7] : memref<6x8xi32, #tpu.memory_space<smem>>
    %41 = arith.index_cast %40 : i32 to index
    %c0_17 = arith.constant 0 : index
    %c0_18 = arith.constant 0 : index
    %42 = vector.load %arg2[%41, %c0_17, %c0_18] : memref<57x1x256xf32, #tpu.memory_space<vmem>>, vector<1x1x256xf32>
    %43 = vector.shape_cast %42 : vector<1x1x256xf32> to vector<1x256xf32>
    %44 = tpu.concatenate %8, %13, %18, %23, %28, %33, %38, %43 in 0 : vector<1x256xf32>, vector<1x256xf32>, vector<1x256xf32>, vector<1x256xf32>, vector<1x256xf32>, vector<1x256xf32>, vector<1x256xf32>, vector<1x256xf32> -> vector<8x256xf32>
    %45 = arith.truncf %3 : vector<8x128xf32> to vector<8x128xbf16>
    %c0_19 = arith.constant 0 : index
    %c0_20 = arith.constant 0 : index
    %46 = vector.load %arg3[%c0_19, %c0_20] : memref<128x256xbf16, #tpu.memory_space<vmem>>, vector<128x256xbf16>
    %cst = arith.constant dense<0.000000e+00> : vector<8x256xf32>
    %47 = tpu.matmul %45, %46, %cst {dimension_numbers = #tpu.dot_dimension_numbers<[1], [0], [0], [1], [0, 0, 1, 1], [], []>} : vector<8x128xbf16>, vector<128x256xbf16>, vector<8x256xf32> -> vector<8x256xf32>
    %48 = arith.addf %44, %47 : vector<8x256xf32>
    %c0_21 = arith.constant 0 : index
    %c0_22 = arith.constant 0 : index
    %49 = vector.load %arg4[%c0_21, %c0_22] : memref<1x256xf32, #tpu.memory_space<vmem>>, vector<1x256xf32>
    %50 = vector.broadcast %49 : vector<1x256xf32> to vector<8x256xf32>
    %51 = arith.addf %48, %50 : vector<8x256xf32>
    %52 = vector.extract_strided_slice %51 {offsets = [0, 0], sizes = [8, 128], strides = [1, 1]} : vector<8x256xf32> to vector<8x128xf32>
    %53 = vector.extract_strided_slice %51 {offsets = [0, 128], sizes = [8, 128], strides = [1, 1]} : vector<8x256xf32> to vector<8x128xf32>
    %cst_23 = arith.constant dense<0xFF800000> : vector<8xf32>
    %54 = vector.multi_reduction <maximumf>, %53, %cst_23 [1] : vector<8x128xf32> to vector<8xf32>
    %55 = vector.shape_cast %54 : vector<8xf32> to vector<8x1xf32>
    %56 = vector.broadcast %55 : vector<8x1xf32> to vector<8x128xf32>
    %57 = arith.subf %53, %56 : vector<8x128xf32>
    %58 = math.exp %57 : vector<8x128xf32>
    %cst_24 = arith.constant dense<0.000000e+00> : vector<8xf32>
    %59 = vector.multi_reduction <add>, %58, %cst_24 [1] : vector<8x128xf32> to vector<8xf32>
    %60 = vector.shape_cast %59 : vector<8xf32> to vector<8x1xf32>
    %61 = math.log %60 : vector<8x1xf32>
    %62 = vector.broadcast %61 : vector<8x1xf32> to vector<8x128xf32>
    %63 = arith.subf %57, %62 : vector<8x128xf32>
    %c0_25 = arith.constant 0 : index
    %c0_26 = arith.constant 0 : index
    %c0_27 = arith.constant 0 : index
    %64 = vector.load %arg6[%c0_25, %c0_26, %c0_27] : memref<1x8x128xf32, #tpu.memory_space<vmem>>, vector<1x8x128xf32>
    %65 = vector.shape_cast %64 : vector<1x8x128xf32> to vector<8x128xf32>
    %66 = vector.shape_cast %63 : vector<8x128xf32> to vector<1x8x128xf32>
    tpu.vector_store %arg6[%c0_25, %c0_26, %c0_27], %66 {strides = array<i32>} : memref<1x8x128xf32, #tpu.memory_space<vmem>>, vector<1x8x128xf32>,
    %c0_28 = arith.constant 0 : index
    %c0_29 = arith.constant 0 : index
    %67 = vector.load %arg7[%c0_28, %c0_29] : memref<8x128xf32, #tpu.memory_space<vmem>>, vector<8x128xf32>
    tpu.vector_store %arg7[%c0_28, %c0_29], %52 {strides = array<i32>} : memref<8x128xf32, #tpu.memory_space<vmem>>, vector<8x128xf32>,
    return
  }
  func.func @transform_0(%arg0: i32, %arg1: memref<6x8xi32, #tpu.memory_space<smem>>) -> (i32, i32, i32) {
    %c0_i32 = arith.constant 0 : i32
    %c0_i32_0 = arith.constant 0 : i32
    %c0_i32_1 = arith.constant 0 : i32
    %c0_i32_2 = arith.constant 0 : i32
    return %c0_i32, %c0_i32_0, %c0_i32_1 : i32, i32, i32
  }
  func.func @transform_1(%arg0: i32, %arg1: memref<6x8xi32, #tpu.memory_space<smem>>) -> (i32, i32) {
    %c0_i32 = arith.constant 0 : i32
    %c0_i32_0 = arith.constant 0 : i32
    %c0_i32_1 = arith.constant 0 : i32
    return %c0_i32, %c0_i32_0 : i32, i32
  }
  func.func @transform_2(%arg0: i32, %arg1: memref<6x8xi32, #tpu.memory_space<smem>>) -> (i32, i32) {
    %c0_i32 = arith.constant 0 : i32
    %c0_i32_0 = arith.constant 0 : i32
    %c0_i32_1 = arith.constant 0 : i32
    return %c0_i32, %c0_i32_0 : i32, i32
  }
  func.func @transform_3(%arg0: i32, %arg1: memref<6x8xi32, #tpu.memory_space<smem>>) -> (i32, i32) {
    %c0_i32 = arith.constant 0 : i32
    %c0_i32_0 = arith.constant 0 : i32
    %c0_i32_1 = arith.constant 0 : i32
    return %c0_i32, %c0_i32_0 : i32, i32
  }
  func.func @transform_4(%arg0: i32, %arg1: memref<6x8xi32, #tpu.memory_space<smem>>) -> (i32, i32, i32) {
    %c0_i32 = arith.constant 0 : i32
    %c0_i32_0 = arith.constant 0 : i32
    %c0_i32_1 = arith.constant 0 : i32
    return %arg0, %c0_i32, %c0_i32_0 : i32, i32, i32
  }
  func.func @transform_5(%arg0: i32, %arg1: memref<6x8xi32, #tpu.memory_space<smem>>) -> (i32, i32) {
    %c0_i32 = arith.constant 0 : i32
    %c0_i32_0 = arith.constant 0 : i32
    %c0_i32_1 = arith.constant 0 : i32
    return %c0_i32, %c0_i32_0 : i32, i32
  }
}

</mosaic_0001>

<llo_original>
// kernel: rnn_forward.1
$region0: #{rnn_forward.1}
  #allocation0 [shape = 'u32[]', space=smem, size = 0x4, offset = 0x4, fixed_abs, tag = 'smem constant byte address 0x4 - core index']
  #allocation1 [shape = 'u32[72,128]{1,0:T(1,128)}', space=vmem, size = 0x9000, scoped, tag = 'internal scratch']
  #allocation2 [shape = 's32[1]{0}', space=sflag, size = 0x4, scoped, tag = 'scoped memory for rnn_forward.1']
  #allocation3 [shape = 'u8[4096]{0}', space=smem, size = 0x1000, scoped, tag = 'prefetched SMEM operand 0']
  %s0 = inlined_call_operand.hbm [shape: s32[6,8], index: 0, kind: input, shape index: {}]
  %s1 = inlined_call_operand.hbm [shape: f32[57,1,256], index: 1, kind: input, shape index: {}]
  %s2 = inlined_call_operand.hbm [shape: bf16[128,256], index: 2, kind: input, shape index: {}]
  %s3 = inlined_call_operand.vmem [shape: f32[1,256], index: 3, kind: input, shape index: {}]
  %s4 = inlined_call_operand.hbm [shape: f32[8,128], index: 4, kind: input, shape index: {}]
  %s5 = inlined_call_operand.hbm [shape: f32[6,8,128], index: 5, kind: output, shape index: {0}]
  %s6 = inlined_call_operand.hbm [shape: f32[8,128], index: 6, kind: output, shape index: {1}]
  %7 = xla_tuple %s5, %s6
  %s8 = sld [smem:[#allocation0]]
  $region73: #{rnn_forward.1} parent=0
    _
  %s10 = ssub.s32 1, %s8
  %s11 = scalar_select 0, %s10, %s8
  %s13 = sshll.u32 %s0, 4
  %s14 = int_to_ptr.hbm [resolvable:$true] %s13
  %16 = dma.hbm_to_smem %s14, 128, [#allocation3], [#allocation2]
  %18 = dma.done [#allocation2], 128
  %19 = sfence
  $region1: #{rnn_forward.1} parent=0
    #allocation4 [shape = 'u8[58368]{0}', space=vmem, size = 0xe400, scoped, tag = 'input window, operand 1, single buffered']
    #allocation5 [shape = 's32[2]{0}', space=sflag, size = 0x8, scoped, tag = 'scoped memory for rnn_forward.1']
    #allocation6 [shape = 's32[2]{0}', space=sflag, size = 0x8, scoped, tag = 'scoped memory for rnn_forward.1']
    #allocation7 [shape = 'u8[65536]{0}', space=vmem, size = 0x10000, scoped, tag = 'input window, operand 2, single buffered']
    #allocation8 [shape = 's32[1]{0}', space=sflag, size = 0x4, scoped, tag = 'scoped memory for rnn_forward.1']
    #allocation9 [shape = 'u8[4096]{0}', space=vmem, size = 0x1000, scoped, tag = 'input window, operand 4, single buffered']
    #allocation10 [shape = 'u8[8192]{0}', space=vmem, size = 0x2000, scoped, tag = 'output window, operand 0']
    #allocation11 [shape = 'u8[4096]{0}', space=vmem, size = 0x1000, scoped, tag = 'output window, operand 1, single buffered']
    #allocation12 [shape = 's32[1]{0}', space=sflag, size = 0x4, scoped, tag = 'scoped memory for rnn_forward.1']
    %20 = vsyncpa [#allocation5], 0
    %21 = vsyncpa [#allocation8], 0
    %22 = vsyncpa [#allocation6], 0
    %s23 = scalar_lea.sflag [#allocation6], 1
    %24 = vsyncpa %s23, 0
    %25 = vsyncpa [#allocation12], 0
    loop: start=0, step=1, limit=8
    $region2: #{rnn_forward.1} parent=1 // loop_pre_header
      _
    $region3: #{rnn_forward.1} parent=1 // loop_header
      %s27 = sphi 0, %s31
      %p28 = scmp.ge.s32.totalorder %s27, 8
      %s35 = sphi 0, %s35
      %s37 = sphi 0, %s35
      %s38 = sphi 0, %s37
      %s52 = sphi 0, %s38
      %s56 = sphi 0, %s56
      %s58 = sphi 0, %s56
      %s59 = sphi 0, %s58
      %s73 = sphi 0, %s59
      %s77 = sphi 0, %s77
      %s79 = sphi 0, %s77
      %s80 = sphi 0, %s79
      %s94 = sphi 0, %s80
      %s98 = sphi 0, %s98
      %s100 = sphi 0, %s98
      %s101 = sphi 0, %s100
      %s115 = sphi 0, %s101
      %s121 = sphi 0, %s123
      %s124 = sphi 0, %s121
      %s125 = sphi 0, %s124
      %s141 = sphi 0, %s125
      %s145 = sphi 0, %s145
      %s147 = sphi 0, %s145
      %s148 = sphi 0, %s147
      %s162 = sphi 0, %s148
    $region4: #{rnn_forward.1} parent=1 // loop_header_branch
      %30 = sbr.rel (%p28) target = $region8
    $region5: #{rnn_forward.1} parent=1 // loop_body
      %s32 = ssub.s32 %s27, 1
      %s33 = ssub.s32 %s27, 2
      %s34 = sadd.s32 %s27, 1
      %s36 = sadd.s32 %s35, 1
      %p39 = scmp.eq.s32.totalorder %s27, 5
      %p40 = scmp.ne.s32.totalorder %s35, %s37
      %p41 = scmp.eq.s32.totalorder %s27, 0
      %p42 = por %p40, %p41
      %p43 = scmp.ne.s32.totalorder %s35, %s37
      %p44 = scmp.eq.s32.totalorder %s32, 5
      %p45 = por %p43, %p44
      %p46 = scmp.ne.s32.totalorder %s37, %s38
      %p47 = scmp.eq.s32.totalorder %s32, 0
      %p48 = por %p46, %p47
      %p49 = scmp.ne.s32.totalorder %s37, %s38
      %p50 = scmp.eq.s32.totalorder %s33, 5
      %p51 = por %p49, %p50
      %p53 = scmp.ne.s32.totalorder %s38, %s52
      %p54 = scmp.eq.s32.totalorder %s33, 0
      %p55 = por %p53, %p54
      %s57 = sadd.s32 %s56, 1
      %p60 = scmp.eq.s32.totalorder %s27, 5
      %p61 = scmp.ne.s32.totalorder %s56, %s58
      %p62 = scmp.eq.s32.totalorder %s27, 0
      %p63 = por %p61, %p62
      %p64 = scmp.ne.s32.totalorder %s56, %s58
      %p65 = scmp.eq.s32.totalorder %s32, 5
      %p66 = por %p64, %p65
      %p67 = scmp.ne.s32.totalorder %s58, %s59
      %p68 = scmp.eq.s32.totalorder %s32, 0
      %p69 = por %p67, %p68
      %p70 = scmp.ne.s32.totalorder %s58, %s59
      %p71 = scmp.eq.s32.totalorder %s33, 5
      %p72 = por %p70, %p71
      %p74 = scmp.ne.s32.totalorder %s59, %s73
      %p75 = scmp.eq.s32.totalorder %s33, 0
      %p76 = por %p74, %p75
      %s78 = sadd.s32 %s77, 1
      %p81 = scmp.eq.s32.totalorder %s27, 5
      %p82 = scmp.ne.s32.totalorder %s77, %s79
      %p83 = scmp.eq.s32.totalorder %s27, 0
      %p84 = por %p82, %p83
      %p85 = scmp.ne.s32.totalorder %s77, %s79
      %p86 = scmp.eq.s32.totalorder %s32, 5
      %p87 = por %p85, %p86
      %p88 = scmp.ne.s32.totalorder %s79, %s80
      %p89 = scmp.eq.s32.totalorder %s32, 0
      %p90 = por %p88, %p89
      %p91 = scmp.ne.s32.totalorder %s79, %s80
      %p92 = scmp.eq.s32.totalorder %s33, 5
      %p93 = por %p91, %p92
      %p95 = scmp.ne.s32.totalorder %s80, %s94
      %p96 = scmp.eq.s32.totalorder %s33, 0
      %p97 = por %p95, %p96
      %s99 = sadd.s32 %s98, 1
      %p102 = scmp.eq.s32.totalorder %s27, 5
      %p103 = scmp.ne.s32.totalorder %s98, %s100
      %p104 = scmp.eq.s32.totalorder %s27, 0
      %p105 = por %p103, %p104
      %p106 = scmp.ne.s32.totalorder %s98, %s100
      %p107 = scmp.eq.s32.totalorder %s32, 5
      %p108 = por %p106, %p107
      %p109 = scmp.ne.s32.totalorder %s100, %s101
      %p110 = scmp.eq.s32.totalorder %s32, 0
      %p111 = por %p109, %p110
      %p112 = scmp.ne.s32.totalorder %s100, %s101
      %p113 = scmp.eq.s32.totalorder %s33, 5
      %p114 = por %p112, %p113
      %p116 = scmp.ne.s32.totalorder %s101, %s115
      %p117 = scmp.eq.s32.totalorder %s33, 0
      %p118 = por %p116, %p117
      %s119 = ssub.s32 %s27, %s34
      %p120 = scmp.eq.s32.totalorder %s119, 0
      %s122 = sadd.s32 %s121, 1
      %s123 = scalar_select %p120, %s121, %s122
      %p126 = pneg %p120
      %p127 = scmp.eq.s32.totalorder %s27, 5
      %p128 = por %p126, %p127
      %p129 = scmp.ne.s32.totalorder %s121, %s124
      %p130 = scmp.eq.s32.totalorder %s27, 0
      %p131 = por %p129, %p130
      %p132 = scmp.ne.s32.totalorder %s121, %s124
      %p133 = scmp.eq.s32.totalorder %s32, 5
      %p134 = por %p132, %p133
      %p135 = scmp.ne.s32.totalorder %s124, %s125
      %p136 = scmp.eq.s32.totalorder %s32, 0
      %p137 = por %p135, %p136
      %p138 = scmp.ne.s32.totalorder %s124, %s125
      %p139 = scmp.eq.s32.totalorder %s33, 5
      %p140 = por %p138, %p139
      %p142 = scmp.ne.s32.totalorder %s125, %s141
      %p143 = scmp.eq.s32.totalorder %s33, 0
      %p144 = por %p142, %p143
      %s146 = sadd.s32 %s145, 1
      %p149 = scmp.eq.s32.totalorder %s27, 5
      %p150 = scmp.ne.s32.totalorder %s145, %s147
      %p151 = scmp.eq.s32.totalorder %s27, 0
      %p152 = por %p150, %p151
      %p153 = scmp.ne.s32.totalorder %s145, %s147
      %p154 = scmp.eq.s32.totalorder %s32, 5
      %p155 = por %p153, %p154
      %p156 = scmp.ne.s32.totalorder %s147, %s148
      %p157 = scmp.eq.s32.totalorder %s32, 0
      %p158 = por %p156, %p157
      %p159 = scmp.ne.s32.totalorder %s147, %s148
      %p160 = scmp.eq.s32.totalorder %s33, 5
      %p161 = por %p159, %p160
      %p163 = scmp.ne.s32.totalorder %s148, %s162
      %p164 = scmp.eq.s32.totalorder %s33, 0
      %p165 = por %p163, %p164
      %p166 = scmp.le.s32.totalorder 1, %s27
      %p167 = scmp.lt.s32.totalorder %s27, 7
      %p168 = pnand %p166, %p167
      %p169 = pneg %p168
      // Predicated region
      $region9: #{rnn_forward.1} parent=5 // pred_check
        _
      $region10: #{rnn_forward.1} parent=5 // pred_check_branch
        %171 = sbr.rel (%p168) target = $region12
      $region11: #{rnn_forward.1} parent=5 // pred_region
        %s172 = ssub.s32 %s27, 1
        // Predicated region
        $region13: #{rnn_forward.1} parent=11 // pred_check
          %p173 = pneg %p48
        $region14: #{rnn_forward.1} parent=11 // pred_check_branch
          %175 = sbr.rel (%p173) target = $region16
        $region15: #{rnn_forward.1} parent=11 // pred_region
          %177 = vsyncadd [#allocation5], 0
          %s178 = sshll.u32 %s1, 4
          %s179 = int_to_ptr.hbm [resolvable:$true] %s178
          %s180 = sshll.u32 [#allocation4], 4
          %s181 = int_to_ptr.vmem [resolvable:$true] %s180
          %186 = dma.hbm_to_vmem [thread:$0]  %s179, 1824, %s181, [#allocation5], 32, 32, 2
        $region16: #{rnn_forward.1} parent=11 // pred_fallthru
          _
        // Predicated region
        $region17: #{rnn_forward.1} parent=11 // pred_check
          %p187 = pneg %p69
        $region18: #{rnn_forward.1} parent=11 // pred_check_branch
          %189 = sbr.rel (%p187) target = $region20
        $region19: #{rnn_forward.1} parent=11 // pred_region
          %191 = vsyncadd [#allocation8], 0
          %s192 = sshll.u32 %s2, 4
          %s193 = int_to_ptr.hbm [resolvable:$true] %s192
          %s194 = sshll.u32 [#allocation7], 4
          %s195 = int_to_ptr.vmem [resolvable:$true] %s194
          %200 = dma.hbm_to_vmem [thread:$0]  %s193, 2048, %s195, [#allocation8], 128, 128, 8
        $region20: #{rnn_forward.1} parent=11 // pred_fallthru
          _
        // Predicated region
        $region21: #{rnn_forward.1} parent=11 // pred_check
          %p201 = pneg %p90
        $region22: #{rnn_forward.1} parent=11 // pred_check_branch
          %203 = sbr.rel (%p201) target = $region24
        $region23: #{rnn_forward.1} parent=11 // pred_region
          _
        $region24: #{rnn_forward.1} parent=11 // pred_fallthru
          _
        // Predicated region
        $region25: #{rnn_forward.1} parent=11 // pred_check
          %p204 = pneg %p111
        $region26: #{rnn_forward.1} parent=11 // pred_check_branch
          %206 = sbr.rel (%p204) target = $region28
        $region27: #{rnn_forward.1} parent=11 // pred_region
          %208 = vsyncadd [#allocation8], 0
          %s210 = sshll.u32 %s4, 4
          %s211 = int_to_ptr.hbm [resolvable:$true] %s210
          %s212 = sshll.u32 [#allocation9], 4
          %s213 = int_to_ptr.vmem [resolvable:$true] %s212
          %215 = dma.hbm_to_vmem [thread:$0]  %s211, 128, %s213, [#allocation8]
        $region28: #{rnn_forward.1} parent=11 // pred_fallthru
          _
      $region12: #{rnn_forward.1} parent=5 // pred_fallthru
        _
      %p216 = scmp.lt.s32.totalorder %s27, 6
      // Predicated region
      $region29: #{rnn_forward.1} parent=5 // pred_check
        %p217 = pneg %p216
      $region30: #{rnn_forward.1} parent=5 // pred_check_branch
        %219 = sbr.rel (%p217) target = $region32
      $region31: #{rnn_forward.1} parent=5 // pred_region
        _
      $region32: #{rnn_forward.1} parent=5 // pred_fallthru
        _
      %p220 = scmp.le.s32.totalorder 1, %s27
      %p221 = scmp.lt.s32.totalorder %s27, 7
      %p222 = pnand %p220, %p221
      %p223 = pneg %p222
      // Predicated region
      $region33: #{rnn_forward.1} parent=5 // pred_check
        _
      $region34: #{rnn_forward.1} parent=5 // pred_check_branch
        %225 = sbr.rel (%p222) target = $region36
      $region35: #{rnn_forward.1} parent=5 // pred_region
        %s226 = ssub.s32 %s27, 1
        // Predicated region
        $region37: #{rnn_forward.1} parent=35 // pred_check
          %p227 = pneg %p48
        $region38: #{rnn_forward.1} parent=35 // pred_check_branch
          %229 = sbr.rel (%p227) target = $region40
        $region39: #{rnn_forward.1} parent=35 // pred_region
          %231 = dma.done [#allocation5], 1824
        $region40: #{rnn_forward.1} parent=35 // pred_fallthru
          _
        // Predicated region
        $region41: #{rnn_forward.1} parent=35 // pred_check
          %p232 = pneg %p69
        $region42: #{rnn_forward.1} parent=35 // pred_check_branch
          %234 = sbr.rel (%p232) target = $region44
        $region43: #{rnn_forward.1} parent=35 // pred_region
          %236 = dma.done [#allocation8], 2048
        $region44: #{rnn_forward.1} parent=35 // pred_fallthru
          _
        // Predicated region
        $region45: #{rnn_forward.1} parent=35 // pred_check
          %p237 = pneg %p111
        $region46: #{rnn_forward.1} parent=35 // pred_check_branch
          %239 = sbr.rel (%p237) target = $region48
        $region47: #{rnn_forward.1} parent=35 // pred_region
          %241 = dma.done [#allocation8], 128
        $region48: #{rnn_forward.1} parent=35 // pred_fallthru
          _
        %p242 = pneg %p48
        %p243 = pneg %p45
        %p244 = pneg %p69
        %p245 = pneg %p66
        %p246 = pneg %p90
        %p247 = pneg %p87
        %p248 = pneg %p111
        %p249 = pneg %p108
        %p250 = pneg %p137
        %p251 = pneg %p134
        %s252 = sand.u32 %s124, 1
        %s253 = scalar_lea.sflag [#allocation6], %s252
        %s254 = sand.u32 %s124, 1
        %s255 = smul.addr %s254, 8
        %s256 = scalar_lea.vmem [#allocation10], %s255
        %p257 = pneg %p158
        %p258 = pneg %p155
        %p259 = scmp.eq.s32.totalorder %s32, 0
        // Predicated region
        $region49: #{rnn_forward.1} parent=35 // pred_check
          %p260 = pneg %p259
        $region50: #{rnn_forward.1} parent=35 // pred_check_branch
          %262 = sbr.rel (%p260) target = $region52
        $region51: #{rnn_forward.1} parent=35 // pred_region
          %v263 = vld [vmem:[#allocation9] sm:$0xff]
          %264 = vst [vmem:[#allocation11] sm:$0xff] %v263
        $region52: #{rnn_forward.1} parent=35 // pred_fallthru
          _
        %v265 = vld [vmem:[#allocation11] sm:$0xff]
        %s266 = smul.u32 %s32, 128
        %s267 = sld [smem:[#allocation3 + %s266]]
        %s268 = smul.u32 %s267, 2
        %s269 = scalar_lea.vmem [#allocation4], %s268
        %v270 = vld [vmem:[%s269] sm:$0x3]
        %s271 = sadd.s32 %s266, 1
        %s272 = sld [smem:[#allocation3 + %s271]]
        %s273 = smul.u32 %s272, 2
        %s274 = scalar_lea.vmem [#allocation4], %s273
        %v275 = vld [vmem:[%s274] sm:$0x3]
        %s276 = sadd.s32 %s266, 2
        %s277 = sld [smem:[#allocation3 + %s276]]
        %s278 = smul.u32 %s277, 2
        %s279 = scalar_lea.vmem [#allocation4], %s278
        %v280 = vld [vmem:[%s279] sm:$0x3]
        %s281 = sadd.s32 %s266, 3
        %s282 = sld [smem:[#allocation3 + %s281]]
        %s283 = smul.u32 %s282, 2
        %s284 = scalar_lea.vmem [#allocation4], %s283
        %v285 = vld [vmem:[%s284] sm:$0x3]
        %s286 = sadd.s32 %s266, 4
        %s287 = sld [smem:[#allocation3 + %s286]]
        %s288 = smul.u32 %s287, 2
        %s289 = scalar_lea.vmem [#allocation4], %s288
        %v290 = vld [vmem:[%s289] sm:$0x3]
        %s291 = sadd.s32 %s266, 5
        %s292 = sld [smem:[#allocation3 + %s291]]
        %s293 = smul.u32 %s292, 2
        %s294 = scalar_lea.vmem [#allocation4], %s293
        %v295 = vld [vmem:[%s294] sm:$0x3]
        %s296 = sadd.s32 %s266, 6
        %s297 = sld [smem:[#allocation3 + %s296]]
        %s298 = smul.u32 %s297, 2
        %s299 = scalar_lea.vmem [#allocation4], %s298
        %v300 = vld [vmem:[%s299] sm:$0x3]
        %s301 = sadd.s32 %s266, 7
        %s302 = sld [smem:[#allocation3 + %s301]]
        %s303 = smul.u32 %s302, 2
        %s304 = scalar_lea.vmem [#allocation4], %s303
        %v305 = vld [vmem:[%s304] sm:$0x3]
        %v307 = vperm.slane %v270, 0
        %v308 = vperm.slane %v270, 1
        %v312 = vperm.slane %v275, 0
        %v313 = vperm.slane %v275, 1
        %v317 = vperm.slane %v280, 0
        %v318 = vperm.slane %v280, 1
        %v322 = vperm.slane %v285, 0
        %v323 = vperm.slane %v285, 1
        %v327 = vperm.slane %v290, 0
        %v328 = vperm.slane %v290, 1
        %v332 = vperm.slane %v295, 0
        %v333 = vperm.slane %v295, 1
        %v337 = vperm.slane %v300, 0
        %v338 = vperm.slane %v300, 1
        %v342 = vperm.slane %v305, 0
        %v343 = vperm.slane %v305, 1
        %vm346 = vcmask 1040384
        %v347 = vsel %vm346, %v307, %v312
        %v348 = vsel %vm346, %v308, %v313
        %vm349 = vcmask 1041408
        %v350 = vsel %vm349, %v347, %v317
        %v351 = vsel %vm349, %v348, %v318
        %vm352 = vcmask 1042432
        %v353 = vsel %vm352, %v350, %v322
        %v354 = vsel %vm352, %v351, %v323
        %vm355 = vcmask 1043456
        %v356 = vsel %vm355, %v353, %v327
        %v357 = vsel %vm355, %v354, %v328
        %vm358 = vcmask 1044480
        %v359 = vsel %vm358, %v356, %v332
        %v360 = vsel %vm358, %v357, %v333
        %vm361 = vcmask 1045504
        %v362 = vsel %vm361, %v359, %v337
        %v363 = vsel %vm361, %v360, %v338
        %vm364 = vcmask 1046528
        %v365 = vsel %vm364, %v362, %v342
        %v366 = vsel %vm364, %v363, %v343
        %v367 = vpack.c.bf16 %v265, %v265
        %v368 = vld [vmem:[#allocation7] sm:$0xff]
        %v369 = vld [vmem:[#allocation7 + $0x8] sm:$0xff]
        %v370 = vld [vmem:[#allocation7 + $0x10] sm:$0xff]
        %v371 = vld [vmem:[#allocation7 + $0x18] sm:$0xff]
        %v372 = vld [vmem:[#allocation7 + $0x20] sm:$0xff]
        %v373 = vld [vmem:[#allocation7 + $0x28] sm:$0xff]
        %v374 = vld [vmem:[#allocation7 + $0x30] sm:$0xff]
        %v375 = vld [vmem:[#allocation7 + $0x38] sm:$0xff]
        %v376 = vld [vmem:[#allocation7 + $0x40] sm:$0xff]
        %v377 = vld [vmem:[#allocation7 + $0x48] sm:$0xff]
        %v378 = vld [vmem:[#allocation7 + $0x50] sm:$0xff]
        %v379 = vld [vmem:[#allocation7 + $0x58] sm:$0xff]
        %v380 = vld [vmem:[#allocation7 + $0x60] sm:$0xff]
        %v381 = vld [vmem:[#allocation7 + $0x68] sm:$0xff]
        %v382 = vld [vmem:[#allocation7 + $0x70] sm:$0xff]
        %v383 = vld [vmem:[#allocation7 + $0x78] sm:$0xff]
        %v400 = vunpack.c.l.b16 %v368
        %v401 = vunpack.c.h.b16 %v368
        %v402 = vunpack.c.l.b16 %v369
        %v403 = vunpack.c.h.b16 %v369
        %v404 = vunpack.c.l.b16 %v370
        %v405 = vunpack.c.h.b16 %v370
        %v406 = vunpack.c.l.b16 %v371
        %v407 = vunpack.c.h.b16 %v371
        %v408 = vunpack.c.l.b16 %v372
        %v409 = vunpack.c.h.b16 %v372
        %v410 = vunpack.c.l.b16 %v373
        %v411 = vunpack.c.h.b16 %v373
        %v412 = vunpack.c.l.b16 %v374
        %v413 = vunpack.c.h.b16 %v374
        %v414 = vunpack.c.l.b16 %v375
        %v415 = vunpack.c.h.b16 %v375
        %v416 = vunpack.c.l.b16 %v376
        %v417 = vunpack.c.h.b16 %v376
        %v418 = vunpack.c.l.b16 %v377
        %v419 = vunpack.c.h.b16 %v377
        %v420 = vunpack.c.l.b16 %v378
        %v421 = vunpack.c.h.b16 %v378
        %v422 = vunpack.c.l.b16 %v379
        %v423 = vunpack.c.h.b16 %v379
        %v424 = vunpack.c.l.b16 %v380
        %v425 = vunpack.c.h.b16 %v380
        %v426 = vunpack.c.l.b16 %v381
        %v427 = vunpack.c.h.b16 %v381
        %v428 = vunpack.c.l.b16 %v382
        %v429 = vunpack.c.h.b16 %v382
        %v430 = vunpack.c.l.b16 %v383
        %v431 = vunpack.c.h.b16 %v383
        %v432 = vpack.c.b16 %v402, %v400
        %v433 = vpack.c.b16 %v403, %v401
        %v434 = vpack.c.b16 %v406, %v404
        %v435 = vpack.c.b16 %v407, %v405
        %v436 = vpack.c.b16 %v410, %v408
        %v437 = vpack.c.b16 %v411, %v409
        %v438 = vpack.c.b16 %v414, %v412
        %v439 = vpack.c.b16 %v415, %v413
        %v440 = vpack.c.b16 %v418, %v416
        %v441 = vpack.c.b16 %v419, %v417
        %v442 = vpack.c.b16 %v422, %v420
        %v443 = vpack.c.b16 %v423, %v421
        %v444 = vpack.c.b16 %v426, %v424
        %v445 = vpack.c.b16 %v427, %v425
        %v446 = vpack.c.b16 %v430, %v428
        %v447 = vpack.c.b16 %v431, %v429
        %464 = vmatpush.bf16.msra.mxu0 %v446
        %465 = vmatpush.bf16.msra.mxu0 %v444
        %466 = vmatpush.bf16.msra.mxu0 %v442
        %467 = vmatpush.bf16.msra.mxu0 %v440
        %468 = vmatpush.bf16.msra.mxu0 %v438
        %469 = vmatpush.bf16.msra.mxu0 %v436
        %470 = vmatpush.bf16.msra.mxu0 %v434
        %471 = vmatpush.bf16.msra.mxu0 %v432
        %472 = vmatmul.bf16.gmra.mxu0 %v367
        %v473 = vpop.f32.mrf.mxu0
        %v474 = vadd.f32 0.0, %v473
        %v475 = vpop.f32.mrf.mxu0
        %476 = vdwg.mxu0
        %477 = vmatpush.bf16.msra.mxu0 %v447
        %478 = vmatpush.bf16.msra.mxu0 %v445
        %479 = vmatpush.bf16.msra.mxu0 %v443
        %480 = vmatpush.bf16.msra.mxu0 %v441
        %481 = vmatpush.bf16.msra.mxu0 %v439
        %482 = vmatpush.bf16.msra.mxu0 %v437
        %483 = vmatpush.bf16.msra.mxu0 %v435
        %484 = vmatpush.bf16.msra.mxu0 %v433
        %485 = vmatmul.bf16.gmra.mxu0 %v367
        %v486 = vpop.f32.mrf.mxu0
        %v487 = vadd.f32 0.0, %v486
        %v488 = vpop.f32.mrf.mxu0
        %489 = vdwg.mxu0
        %v490 = vadd.f32 %v365, %v474
        %v491 = vadd.f32 %v366, %v487
        %v492 = vld [vmem:[%s3] sm:$0x3]
        %v494 = vperm.slane %v492, 0
        %v495 = vperm.slane %v492, 1
        %v498 = vadd.f32 %v490, %v494
        %v499 = vadd.f32 %v491, %v495
        %500 = vmax.xlane.f32.xlu0 %v499
        %v501 = vpop.xlane.xlu0 %500
        %v502 = vsub.f32 %v499, %v501
        %v503 = vmul.f32 %v502, 1.442695
        %v504 = vpow.pop %v503
        %505 = vadd.xlane.f32.xlu0 %v504
        %v506 = vpop.xlane.xlu0 %505
        %v507 = vlog2.pop %v506
        %v508 = vmul.f32 %v507, 0.6931472
        %v509 = vsub.f32 %v502, %v508
        %510 = vst [vmem:[%s256] sm:$0xff] %v509
        %511 = vst [vmem:[#allocation11] sm:$0xff] %v498
        %s512 = sand.u32 %s124, 1
        %s513 = scalar_lea.sflag [#allocation6], %s512
        %s514 = sand.u32 %s124, 1
        %s515 = smul.addr %s514, 8
        %s516 = scalar_lea.vmem [#allocation10], %s515
        // Predicated region
        $region53: #{rnn_forward.1} parent=35 // pred_check
          %p517 = pneg %p134
        $region54: #{rnn_forward.1} parent=35 // pred_check_branch
          %519 = sbr.rel (%p517) target = $region56
        $region55: #{rnn_forward.1} parent=35 // pred_region
          %521 = vsyncadd %s513, 0
          %s522 = smul.addr %s32, 8
          %s523 = scalar_lea.hbm %s5, %s522
          %s525 = sshll.u32 %s516, 4
          %s526 = int_to_ptr.vmem [resolvable:$true] %s525
          %s527 = sshll.u32 %s523, 4
          %s528 = int_to_ptr.hbm [resolvable:$true] %s527
          %530 = dma.vmem_to_hbm [thread:$0]  %s526, 128, %s528, %s513
        $region56: #{rnn_forward.1} parent=35 // pred_fallthru
          _
        // Predicated region
        $region57: #{rnn_forward.1} parent=35 // pred_check
          %p531 = pneg %p155
        $region58: #{rnn_forward.1} parent=35 // pred_check_branch
          %533 = sbr.rel (%p531) target = $region60
        $region59: #{rnn_forward.1} parent=35 // pred_region
          %535 = vsyncadd [#allocation12], 0
          %s537 = sshll.u32 [#allocation11], 4
          %s538 = int_to_ptr.vmem [resolvable:$true] %s537
          %s539 = sshll.u32 %s6, 4
          %s540 = int_to_ptr.hbm [resolvable:$true] %s539
          %542 = dma.vmem_to_hbm [thread:$0]  %s538, 128, %s540, [#allocation12]
        $region60: #{rnn_forward.1} parent=35 // pred_fallthru
          _
        // Predicated region
        $region61: #{rnn_forward.1} parent=35 // pred_check
          %p543 = pneg %p155
        $region62: #{rnn_forward.1} parent=35 // pred_check_branch
          %545 = sbr.rel (%p543) target = $region64
        $region63: #{rnn_forward.1} parent=35 // pred_region
          %547 = dma.done [#allocation12], 128
        $region64: #{rnn_forward.1} parent=35 // pred_fallthru
          _
      $region36: #{rnn_forward.1} parent=5 // pred_fallthru
        _
      %p548 = scmp.le.s32.totalorder 2, %s27
      // Predicated region
      $region65: #{rnn_forward.1} parent=5 // pred_check
        %p549 = pneg %p548
      $region66: #{rnn_forward.1} parent=5 // pred_check_branch
        %551 = sbr.rel (%p549) target = $region68
      $region67: #{rnn_forward.1} parent=5 // pred_region
        %s552 = ssub.s32 %s27, 2
        // Predicated region
        $region69: #{rnn_forward.1} parent=67 // pred_check
          %p553 = pneg %p140
        $region70: #{rnn_forward.1} parent=67 // pred_check_branch
          %555 = sbr.rel (%p553) target = $region72
        $region71: #{rnn_forward.1} parent=67 // pred_region
          %s556 = sand.u32 %s125, 1
          %s557 = scalar_lea.sflag [#allocation6], %s556
          %s558 = sand.u32 %s125, 1
          %s559 = smul.addr %s558, 8
          %s560 = scalar_lea.vmem [#allocation10], %s559
          %562 = dma.done %s557, 128
        $region72: #{rnn_forward.1} parent=67 // pred_fallthru
          _
      $region68: #{rnn_forward.1} parent=5 // pred_fallthru
        _
    $region6: #{rnn_forward.1} parent=1 // loop_footer
      %s31 = sadd.s32 1, %s27
    $region7: #{rnn_forward.1} parent=1 // loop_footer_branch
      %26 = sbr.rel target = $region3
    $region8: #{rnn_forward.1} parent=1 // loop_exit
      _
    %563 = vsyncpa [#allocation5], 1
    %s564 = scalar_lea.sflag [#allocation5], 1
    %565 = vsyncpa %s564, 1
    %566 = vsyncpa [#allocation8], 1
    %567 = vsyncpa [#allocation6], 1
    %s568 = scalar_lea.sflag [#allocation6], 1
    %569 = vsyncpa %s568, 1
    %570 = vsyncpa [#allocation12], 1

</llo_original>
